<compile_context>
chip_gen: v7x
topology: tpu7x:2x2x1
jax: 0.10.0
libtpu: 0.0.40
codegen_flags: <defaults>
</compile_context>

<pallas_src>
import functools
import time

import jax
import jax.numpy as jnp
from jax.experimental import pallas as pl
from jax.experimental.pallas import tpu as pltpu

IN_SCALE = 0.0472
IN_ZP = 64.0
OUT_SCALE = 0.1      # synthetic deterministic output quant params for the convs
OUT_ZP = 64.0


def _round_up(v, m):
    return (v + m - 1) // m * m


def fake_quant_u8(x, scale=IN_SCALE, zp=IN_ZP):
    q = jnp.clip(jnp.round(x / scale) + zp, 0.0, 255.0)
    return (q - zp) * scale


# ----------------------------- Pallas kernels ------------------------------

def conv_matmul_kernel(a_ref, b_ref, bias_ref, o_ref, *, alpha_over_s, out_scale, out_zp):
    # a_ref: (tm, Kp) bf16 input integer levels (q - zp), zero-padded along K.
    # b_ref: (Kp, Coutp) bf16 int8 weight levels, zero-padded along K / Cout.
    # bias_ref: (1, Coutp) f32 bias pre-divided by out_scale.
    # Integer-valued bf16 operands -> exact products, exact f32 accumulation.
    acc = jnp.dot(a_ref[...], b_ref[...], preferred_element_type=jnp.float32)
    # requantization epilogue: q = clip(round(acc*alpha/s + b/s) + zp, 0, 255)
    q = jnp.clip(jnp.round(acc * alpha_over_s + bias_ref[...]) + out_zp, 0.0, 255.0)
    o_ref[...] = ((q - out_zp) * out_scale).astype(o_ref.dtype)


def relu_kernel(x_ref, o_ref):
    # ReLU on a quantized tensor == max(x, 0) in the dequantized domain.
    o_ref[...] = jnp.maximum(x_ref[...], 0.0)


def maxpool_kernel(w_ref, o_ref):
    # w_ref: (kk, rows, lanes) stacked pooling windows; max over the window axis.
    o_ref[...] = jnp.max(w_ref[...], axis=0)


# ------------------------------- op builders --------------------------------

def make_conv_op(w_levels, bias, w_scale, stride, pad,
                 out_scale=OUT_SCALE, out_zp=OUT_ZP, in_scale=IN_SCALE):
    """Fake-quantized conv2d as a jitted wrapper around one Pallas matmul."""
    Cout, Cin, KH, KW = w_levels.shape
    K = KH * KW * Cin
    Kp = _round_up(K, 128)          # lane-aligned contraction dim
    Coutp = _round_up(Cout, 128)    # lane-dense output stores (unmasked vst)

    # (K, Cout) integer-level weight matrix, zero-padded, bf16 (exact).
    B = jnp.transpose(w_levels, (2, 3, 1, 0)).reshape(K, Cout)
    B = jnp.pad(B, ((0, Kp - K), (0, Coutp - Cout))).astype(jnp.bfloat16)
    # bias pre-divided by out_scale so the epilogue has no division and only
    # one multiply before the round.
    bias_p = jnp.pad(bias / out_scale, (0, Coutp - Cout)).reshape(1, Coutp).astype(jnp.float32)
    alpha_over_s = float(in_scale) * float(w_scale) / float(out_scale)
    inv_in_scale = 1.0 / float(in_scale)

    kern = functools.partial(conv_matmul_kernel, alpha_over_s=alpha_over_s,
                             out_scale=out_scale, out_zp=out_zp)

    @jax.jit
    def op(x_nchw):
        N, _, H, W = x_nchw.shape
        Ho = (H + 2 * pad - KH) // stride + 1
        Wo = (W + 2 * pad - KW) // stride + 1

        # recover integer levels (q - zp) exactly from the fake-quant values
        xl = jnp.round(x_nchw * inv_in_scale)
        x = jnp.transpose(xl, (0, 2, 3, 1))                          # NHWC
        xp = jnp.pad(x, ((0, 0), (pad, pad), (pad, pad), (0, 0)))    # zp pad -> 0

        cols = []
        for kh in range(KH):
            for kw in range(KW):
                cols.append(jax.lax.slice(
                    xp, (0, kh, kw, 0),
                    (N, kh + stride * (Ho - 1) + 1,
                     kw + stride * (Wo - 1) + 1, Cin),
                    (1, stride, stride, 1)))
        patches = jnp.stack(cols, axis=3)                            # (N,Ho,Wo,KK,Cin)
        A = patches.reshape(N * Ho * Wo, K)
        A = jnp.pad(A, ((0, 0), (0, Kp - K))).astype(jnp.bfloat16)

        M = N * Ho * Wo
        Mp = _round_up(M, 8)
        if Mp != M:
            A = jnp.pad(A, ((0, Mp - M), (0, 0)))
        # Single block for tiny ops; split M into two "parallel" steps only
        # when large enough (feeds the second TensorCore on v7x, negligible
        # overhead on single-TC chips).
        tm = Mp // 2 if (Mp >= 512 and Mp % 16 == 0) else Mp
        grid = (Mp // tm,)

        out = pl.pallas_call(
            kern,
            out_shape=jax.ShapeDtypeStruct((Mp, Coutp), jnp.float32),
            grid=grid,
            in_specs=[pl.BlockSpec((tm, Kp), lambda m: (m, 0)),
                      pl.BlockSpec((Kp, Coutp), lambda m: (0, 0)),
                      pl.BlockSpec((1, Coutp), lambda m: (0, 0))],
            out_specs=pl.BlockSpec((tm, Coutp), lambda m: (m, 0)),
            compiler_params=pltpu.CompilerParams(
                dimension_semantics=("parallel",)),
        )(A, B, bias_p)

        y = out[:M, :Cout].reshape(N, Ho, Wo, Cout)
        return jnp.transpose(y, (0, 3, 1, 2))                        # back to NCHW

    return op


def _lane_dense_2d(n, last_dim_fallback):
    """Pick a lane-dense (rows, lanes) factorization of n if possible."""
    for lanes in (512, 256, 128):
        if n % (8 * lanes) == 0:
            return n // lanes, lanes
    return None, last_dim_fallback


def make_maxpool_op(ksize=3, stride=2, pad=1):
    """MaxPool2d(kernel=3, stride=2, padding=1) on NCHW, lane-dense kernel."""
    kk = ksize * ksize

    @jax.jit
    def op(x_nchw):
        N, C, H, W = x_nchw.shape
        x = jnp.transpose(x_nchw, (0, 2, 3, 1))
        neg = jnp.float32(-3e38)                                     # pad never wins
        xp = jnp.pad(x, ((0, 0), (pad, pad), (pad, pad), (0, 0)),
                     constant_values=neg)
        Ho = (H + 2 * pad - ksize) // stride + 1
        Wo = (W + 2 * pad - ksize) // stride + 1

        cols = []
        for kh in range(ksize):
            for kw in range(ksize):
                cols.append(jax.lax.slice(
                    xp, (0, kh, kw, 0),
                    (N, kh + stride * (Ho - 1) + 1,
                     kw + stride * (Wo - 1) + 1, C),
                    (1, stride, stride, 1)))
        win = jnp.stack(cols, axis=0)                                # (kk,N,Ho,Wo,C)

        n_out = N * Ho * Wo * C
        rows, lanes = _lane_dense_2d(n_out, C)
        if rows is not None:
            win2 = win.reshape(kk, rows, lanes)                      # lane-dense
        else:
            win2 = win.reshape(kk, N * Ho * Wo, C)                   # fallback
        _, M2, L = win2.shape

        out = pl.pallas_call(
            maxpool_kernel,
            out_shape=jax.ShapeDtypeStruct((M2, L), jnp.float32),
            grid=(1,),
            in_specs=[pl.BlockSpec((kk, M2, L), lambda i: (0, 0, 0))],
            out_specs=pl.BlockSpec((M2, L), lambda i: (0, 0)),
        )(win2)
        y = out.reshape(N, Ho, Wo, C)
        return jnp.transpose(y, (0, 3, 1, 2))

    return op


def make_relu_op():
    @jax.jit
    def op(x_nchw):
        shape = x_nchw.shape
        n = x_nchw.size
        rows, lanes = _lane_dense_2d(n, shape[-1])
        if rows is not None:
            x2 = x_nchw.reshape(rows, lanes)                         # lane-dense
        else:
            x2 = x_nchw.reshape(-1, shape[-1])                       # fallback
        M, L = x2.shape
        out = pl.pallas_call(
            relu_kernel,
            out_shape=jax.ShapeDtypeStruct((M, L), jnp.float32),
            grid=(1,),
            in_specs=[pl.BlockSpec((M, L), lambda i: (0, 0))],
            out_specs=pl.BlockSpec((M, L), lambda i: (0, 0)),
        )(x2)
        return out.reshape(shape)

    return op


# ------------------------------ module analog -------------------------------

class ResNet18Pallas:
    """Small-shape analog of serdab/resnet18/client.py::ResNet18.

    Spatial dims scaled down (224->32, 112->16, 56->8, 28->4), batch=2;
    channel counts and op configs match the original module.
    """

    def __init__(self, batch_size=2, key=jax.random.PRNGKey(0)):
        B = batch_size
        self.in_shapes = {
            0: (B, 3, 32, 32),    # was [B, 3, 224, 224]
            1: (B, 64, 16, 16),   # was [B, 64, 112, 112]
            2: (B, 64, 8, 8),     # was [B, 64, 56, 56]
            3: (B, 64, 8, 8),
            4: (B, 64, 8, 8),
            5: (B, 64, 8, 8),
            6: (B, 64, 8, 8),
            7: (B, 64, 8, 8),
            8: (B, 64, 4, 4),     # was [B, 64, 28, 28]
        }
        conv_cfg = {               # idx: (cin, cout, ksize, stride, pad)
            0: (3, 64, 7, 2, 3),
            2: (64, 64, 3, 1, 1),
            4: (64, 64, 3, 1, 1),
            5: (64, 64, 3, 1, 1),
            7: (64, 64, 3, 1, 1),
            8: (64, 128, 3, 2, 1),
        }

        keys = jax.random.split(key, 2 * len(conv_cfg))
        self.params = {}
        self.ops = {}
        for n, (idx, (cin, cout, ksz, stride, pad)) in enumerate(sorted(conv_cfg.items())):
            kw_, kb_ = keys[2 * n], keys[2 * n + 1]
            w = jax.random.normal(kw_, (cout, cin, ksz, ksz), jnp.float32) * 0.05
            ws = jnp.max(jnp.abs(w)) / 127.0
            w_levels = jnp.clip(jnp.round(w / ws), -127.0, 127.0)     # int8 levels
            wq = w_levels * ws                                        # dequantized weights
            b = jax.random.normal(kb_, (cout,), jnp.float32) * 0.01
            self.params[idx] = (wq, b, stride, pad)
            self.ops[idx] = make_conv_op(w_levels, b, ws, stride, pad)
        self.ops[1] = make_maxpool_op(ksize=3, stride=2, pad=1)
        self.ops[3] = make_relu_op()
        self.ops[6] = make_relu_op()

        self.time = {}
        self.outputs = {}

    def forward(self, i):
        key = jax.random.fold_in(jax.random.PRNGKey(0), 123)
        while True:
            if i in self.ops:
                key, sub = jax.random.split(key)
                x = jax.random.uniform(sub, self.in_shapes[i], dtype=jnp.float32)
                xq = fake_quant_u8(x)                    # quantize_per_tensor analog
                op = self.ops[i]
                jax.block_until_ready(op(xq))            # warmup / compile
                jax.block_until_ready(op(xq))            # second warmup
                start = time.time()
                out = jax.block_until_ready(op(xq))
                self.time['OP{}'.format(i)] = time.time() - start
                self.outputs['OP{}'.format(i)] = out
                i = i + 1
            else:
                return i


# ------------------------------ reference check -----------------------------

def _ref_conv(xq, w, b, stride, pad, out_scale, out_zp):
    y = jax.lax.conv_general_dilated(
        xq, w, (stride, stride), ((pad, pad), (pad, pad)),
        dimension_numbers=('NCHW', 'OIHW', 'NCHW'))
    y = y + b.reshape(1, -1, 1, 1)
    q = jnp.clip(jnp.round(y / out_scale) + out_zp, 0.0, 255.0)
    return (q - out_zp) * out_scale


if __name__ == "__main__":
    model = ResNet18Pallas(batch_size=2, key=jax.random.PRNGKey(0))
    last = model.forward(0)
    assert last == 9, f"expected final op index 9, got {last}"

    # shape checks (small-shape analogs of the original op outputs)
    assert model.outputs['OP0'].shape == (2, 64, 16, 16)
    assert model.outputs['OP1'].shape == (2, 64, 8, 8)
    assert model.outputs['OP2'].shape == (2, 64, 8, 8)
    assert model.outputs['OP3'].shape == (2, 64, 8, 8)
    assert model.outputs['OP8'].shape == (2, 128, 2, 2)

    # conv numeric checks vs XLA reference (same fake-quant math; at most one
    # quant step of difference from rounding ties)
    for idx in (0, 2, 8):
        kchk = jax.random.PRNGKey(100 + idx)
        xchk = fake_quant_u8(jax.random.uniform(kchk, model.in_shapes[idx], jnp.float32))
        wq, b, s, p = model.params[idx]
        got = model.ops[idx](xchk)
        ref = _ref_conv(xchk, wq, b, s, p, OUT_SCALE, OUT_ZP)
        err = float(jnp.max(jnp.abs(got - ref)))
        assert err <= OUT_SCALE + 1e-5, f"OP{idx} conv mismatch: max abs err {err}"

    # maxpool check vs lax.reduce_window
    xchk = fake_quant_u8(jax.random.uniform(jax.random.PRNGKey(200),
                                            model.in_shapes[1], jnp.float32))
    got = model.ops[1](xchk)
    ref = jax.lax.reduce_window(xchk, -jnp.inf, jax.lax.max,
                                (1, 1, 3, 3), (1, 1, 2, 2),
                                ((0, 0), (0, 0), (1, 1), (1, 1)))
    err = float(jnp.max(jnp.abs(got - ref)))
    assert err <= 1e-6, f"maxpool mismatch: max abs err {err}"

    # relu check
    xchk = fake_quant_u8(jax.random.uniform(jax.random.PRNGKey(300),
                                            model.in_shapes[3], jnp.float32))
    err = float(jnp.max(jnp.abs(model.ops[3](xchk) - jnp.maximum(xchk, 0.0))))
    assert err <= 1e-6, f"relu mismatch: max abs err {err}"

    jax.block_until_ready(model.outputs['OP8'])
    print("KERNEL_OK")
</pallas_src>

<mosaic_0001>
module attributes {stable_mosaic.version = 11 : i64} {
  func.func @conv_matmul_kernel(%arg0: i32, %arg1: memref<256x256xbf16, #tpu.memory_space<vmem>>, %arg2: memref<256x128xbf16, #tpu.memory_space<vmem>>, %arg3: memref<1x128xf32, #tpu.memory_space<vmem>>, %arg4: memref<256x128xf32, #tpu.memory_space<vmem>>) attributes {dimension_semantics = [#tpu.dimension_semantics<parallel>], iteration_bounds = array<i64: 2>, scalar_prefetch = 0 : i64, scratch_operands = 0 : i64, tpu.core_type = #tpu.core_type<tc>, window_params = [{transform_indices = @transform_0, window_bounds = array<i64: 256, 256>}, {pipeline_mode = #tpu.pipeline_mode<synchronous>, transform_indices = @transform_1, window_bounds = array<i64: 256, 128>}, {pipeline_mode = #tpu.pipeline_mode<synchronous>, transform_indices = @transform_2, window_bounds = array<i64: 1, 128>}, {transform_indices = @transform_3, window_bounds = array<i64: 256, 128>}]} {
    %c0 = arith.constant 0 : index
    %c0_0 = arith.constant 0 : index
    %0 = vector.load %arg1[%c0, %c0_0] : memref<256x256xbf16, #tpu.memory_space<vmem>>, vector<256x256xbf16>
    %c0_1 = arith.constant 0 : index
    %c0_2 = arith.constant 0 : index
    %1 = vector.load %arg2[%c0_1, %c0_2] : memref<256x128xbf16, #tpu.memory_space<vmem>>, vector<256x128xbf16>
    %cst = arith.constant dense<0.000000e+00> : vector<256x128xf32>
    %2 = tpu.matmul %0, %1, %cst {dimension_numbers = #tpu.dot_dimension_numbers<[1], [0], [0], [1], [0, 0, 1, 1], [], []>} : vector<256x256xbf16>, vector<256x128xbf16>, vector<256x128xf32> -> vector<256x128xf32>
    %cst_3 = arith.constant 7.17800402E-4 : f32
    %3 = vector.broadcast %cst_3 : f32 to vector<256x128xf32>
    %4 = arith.mulf %2, %3 : vector<256x128xf32>
    %c0_4 = arith.constant 0 : index
    %c0_5 = arith.constant 0 : index
    %5 = vector.load %arg3[%c0_4, %c0_5] : memref<1x128xf32, #tpu.memory_space<vmem>>, vector<1x128xf32>
    %6 = vector.broadcast %5 : vector<1x128xf32> to vector<256x128xf32>
    %7 = arith.addf %4, %6 : vector<256x128xf32>
    %8 = math.roundeven %7 : vector<256x128xf32>
    %cst_6 = arith.constant 6.400000e+01 : f32
    %9 = vector.broadcast %cst_6 : f32 to vector<256x128xf32>
    %10 = arith.addf %8, %9 : vector<256x128xf32>
    %cst_7 = arith.constant 0.000000e+00 : f32
    %cst_8 = arith.constant 2.550000e+02 : f32
    %11 = vector.broadcast %cst_7 : f32 to vector<256x128xf32>
    %12 = arith.maximumf %11, %10 : vector<256x128xf32>
    %13 = vector.broadcast %cst_8 : f32 to vector<256x128xf32>
    %14 = arith.minimumf %13, %12 : vector<256x128xf32>
    %cst_9 = arith.constant 6.400000e+01 : f32
    %15 = vector.broadcast %cst_9 : f32 to vector<256x128xf32>
    %16 = arith.subf %14, %15 : vector<256x128xf32>
    %cst_10 = arith.constant 1.000000e-01 : f32
    %17 = vector.broadcast %cst_10 : f32 to vector<256x128xf32>
    %18 = arith.mulf %16, %17 : vector<256x128xf32>
    %c0_11 = arith.constant 0 : index
    %c0_12 = arith.constant 0 : index
    %19 = vector.load %arg4[%c0_11, %c0_12] : memref<256x128xf32, #tpu.memory_space<vmem>>, vector<256x128xf32>
    tpu.vector_store %arg4[%c0_11, %c0_12], %18 {strides = array<i32>} : memref<256x128xf32, #tpu.memory_space<vmem>>, vector<256x128xf32>,
    return
  }
  func.func @transform_0(%arg0: i32) -> (i32, i32) {
    %c0_i32 = arith.constant 0 : i32
    %c0_i32_0 = arith.constant 0 : i32
    return %arg0, %c0_i32 : i32, i32
  }
  func.func @transform_1(%arg0: i32) -> (i32, i32) {
    %c0_i32 = arith.constant 0 : i32
    %c0_i32_0 = arith.constant 0 : i32
    %c0_i32_1 = arith.constant 0 : i32
    return %c0_i32, %c0_i32_0 : i32, i32
  }
  func.func @transform_2(%arg0: i32) -> (i32, i32) {
    %c0_i32 = arith.constant 0 : i32
    %c0_i32_0 = arith.constant 0 : i32
    %c0_i32_1 = arith.constant 0 : i32
    return %c0_i32, %c0_i32_0 : i32, i32
  }
  func.func @transform_3(%arg0: i32) -> (i32, i32) {
    %c0_i32 = arith.constant 0 : i32
    %c0_i32_0 = arith.constant 0 : i32
    return %arg0, %c0_i32 : i32, i32
  }
}

</mosaic_0001>

<llo_original>
// kernel: op.1
$region0: #{op.1}
  #allocation0 [shape = 'u32[]', space=smem, size = 0x4, offset = 0x4, fixed_abs, tag = 'smem constant byte address 0x4 - core index']
  #allocation1 [shape = 'u32[144,128]{1,0:T(1,128)}', space=vmem, size = 0x12000, scoped, tag = 'internal scratch']
  %s0 = inlined_call_operand.vmem [shape: bf16[512,256], index: 0, kind: input, shape index: {}]
  %s1 = inlined_call_operand.vmem [shape: bf16[256,128], index: 1, kind: input, shape index: {}]
  %s2 = inlined_call_operand.vmem [shape: f32[1,128], index: 2, kind: input, shape index: {}]
  %s3 = inlined_call_operand.hbm [shape: f32[512,128], index: 3, kind: output, shape index: {}]
  %s4 = sld [smem:[#allocation0]]
  $region45: #{op.1} parent=0
    _
  %s6 = ssub.s32 1, %s4
  %s7 = scalar_select 0, %s6, %s4
  $region1: #{op.1} parent=0
    #allocation2 [shape = 'u8[262144]{0}', space=vmem, size = 0x40000, scoped, tag = 'output window, operand 0']
    #allocation3 [shape = 's32[2]{0}', space=sflag, size = 0x8, scoped, tag = 'scoped memory for op.1']
    %8 = vsyncpa [#allocation3], 0
    %s9 = scalar_lea.sflag [#allocation3], 1
    %10 = vsyncpa %s9, 0
    loop: start=0, step=1, limit=4
    $region2: #{op.1} parent=1 // loop_pre_header
      _
    $region3: #{op.1} parent=1 // loop_header
      %s12 = sphi 0, %s16
      %p13 = scmp.ge.s32.totalorder %s12, 4
      %s22 = sphi 0, %s24
      %s25 = sphi 0, %s22
      %s26 = sphi 0, %s25
      %s42 = sphi 0, %s26
      %s46 = sphi 0, %s46
      %s48 = sphi 0, %s46
      %s49 = sphi 0, %s48
      %s63 = sphi 0, %s49
      %s67 = sphi 0, %s67
      %s69 = sphi 0, %s67
      %s70 = sphi 0, %s69
      %s84 = sphi 0, %s70
      %s90 = sphi 0, %s92
      %s93 = sphi 0, %s90
      %s94 = sphi 0, %s93
      %s110 = sphi 0, %s94
    $region4: #{op.1} parent=1 // loop_header_branch
      %15 = sbr.rel (%p13) target = $region8
    $region5: #{op.1} parent=1 // loop_body
      %s17 = ssub.s32 %s12, 1
      %s18 = ssub.s32 %s12, 2
      %s19 = sadd.s32 %s12, 1
      %s20 = ssub.s32 %s12, %s19
      %p21 = scmp.eq.s32.totalorder %s20, 0
      %s23 = sadd.s32 %s22, 1
      %s24 = scalar_select %p21, %s22, %s23
      %p27 = pneg %p21
      %p28 = scmp.eq.s32.totalorder %s12, 1
      %p29 = por %p27, %p28
      %p30 = scmp.ne.s32.totalorder %s22, %s25
      %p31 = scmp.eq.s32.totalorder %s12, 0
      %p32 = por %p30, %p31
      %p33 = scmp.ne.s32.totalorder %s22, %s25
      %p34 = scmp.eq.s32.totalorder %s17, 1
      %p35 = por %p33, %p34
      %p36 = scmp.ne.s32.totalorder %s25, %s26
      %p37 = scmp.eq.s32.totalorder %s17, 0
      %p38 = por %p36, %p37
      %p39 = scmp.ne.s32.totalorder %s25, %s26
      %p40 = scmp.eq.s32.totalorder %s18, 1
      %p41 = por %p39, %p40
      %p43 = scmp.ne.s32.totalorder %s26, %s42
      %p44 = scmp.eq.s32.totalorder %s18, 0
      %p45 = por %p43, %p44
      %s47 = sadd.s32 %s46, 1
      %p50 = scmp.eq.s32.totalorder %s12, 1
      %p51 = scmp.ne.s32.totalorder %s46, %s48
      %p52 = scmp.eq.s32.totalorder %s12, 0
      %p53 = por %p51, %p52
      %p54 = scmp.ne.s32.totalorder %s46, %s48
      %p55 = scmp.eq.s32.totalorder %s17, 1
      %p56 = por %p54, %p55
      %p57 = scmp.ne.s32.totalorder %s48, %s49
      %p58 = scmp.eq.s32.totalorder %s17, 0
      %p59 = por %p57, %p58
      %p60 = scmp.ne.s32.totalorder %s48, %s49
      %p61 = scmp.eq.s32.totalorder %s18, 1
      %p62 = por %p60, %p61
      %p64 = scmp.ne.s32.totalorder %s49, %s63
      %p65 = scmp.eq.s32.totalorder %s18, 0
      %p66 = por %p64, %p65
      %s68 = sadd.s32 %s67, 1
      %p71 = scmp.eq.s32.totalorder %s12, 1
      %p72 = scmp.ne.s32.totalorder %s67, %s69
      %p73 = scmp.eq.s32.totalorder %s12, 0
      %p74 = por %p72, %p73
      %p75 = scmp.ne.s32.totalorder %s67, %s69
      %p76 = scmp.eq.s32.totalorder %s17, 1
      %p77 = por %p75, %p76
      %p78 = scmp.ne.s32.totalorder %s69, %s70
      %p79 = scmp.eq.s32.totalorder %s17, 0
      %p80 = por %p78, %p79
      %p81 = scmp.ne.s32.totalorder %s69, %s70
      %p82 = scmp.eq.s32.totalorder %s18, 1
      %p83 = por %p81, %p82
      %p85 = scmp.ne.s32.totalorder %s70, %s84
      %p86 = scmp.eq.s32.totalorder %s18, 0
      %p87 = por %p85, %p86
      %s88 = ssub.s32 %s12, %s19
      %p89 = scmp.eq.s32.totalorder %s88, 0
      %s91 = sadd.s32 %s90, 1
      %s92 = scalar_select %p89, %s90, %s91
      %p95 = pneg %p89
      %p96 = scmp.eq.s32.totalorder %s12, 1
      %p97 = por %p95, %p96
      %p98 = scmp.ne.s32.totalorder %s90, %s93
      %p99 = scmp.eq.s32.totalorder %s12, 0
      %p100 = por %p98, %p99
      %p101 = scmp.ne.s32.totalorder %s90, %s93
      %p102 = scmp.eq.s32.totalorder %s17, 1
      %p103 = por %p101, %p102
      %p104 = scmp.ne.s32.totalorder %s93, %s94
      %p105 = scmp.eq.s32.totalorder %s17, 0
      %p106 = por %p104, %p105
      %p107 = scmp.ne.s32.totalorder %s93, %s94
      %p108 = scmp.eq.s32.totalorder %s18, 1
      %p109 = por %p107, %p108
      %p111 = scmp.ne.s32.totalorder %s94, %s110
      %p112 = scmp.eq.s32.totalorder %s18, 0
      %p113 = por %p111, %p112
      %p114 = scmp.le.s32.totalorder 1, %s12
      %p115 = scmp.lt.s32.totalorder %s12, 3
      %p116 = pnand %p114, %p115
      %p117 = pneg %p116
      // Predicated region
      $region9: #{op.1} parent=5 // pred_check
        _
      $region10: #{op.1} parent=5 // pred_check_branch
        %119 = sbr.rel (%p116) target = $region12
      $region11: #{op.1} parent=5 // pred_region
        %s120 = ssub.s32 %s12, 1
        // Predicated region
        $region13: #{op.1} parent=11 // pred_check
          %p121 = pneg %p59
        $region14: #{op.1} parent=11 // pred_check_branch
          %123 = sbr.rel (%p121) target = $region16
        $region15: #{op.1} parent=11 // pred_region
          _
        $region16: #{op.1} parent=11 // pred_fallthru
          _
        // Predicated region
        $region17: #{op.1} parent=11 // pred_check
          %p124 = pneg %p80
        $region18: #{op.1} parent=11 // pred_check_branch
          %126 = sbr.rel (%p124) target = $region20
        $region19: #{op.1} parent=11 // pred_region
          _
        $region20: #{op.1} parent=11 // pred_fallthru
          _
      $region12: #{op.1} parent=5 // pred_fallthru
        _
      %p127 = scmp.lt.s32.totalorder %s12, 2
      // Predicated region
      $region21: #{op.1} parent=5 // pred_check
        %p128 = pneg %p127
      $region22: #{op.1} parent=5 // pred_check_branch
        %130 = sbr.rel (%p128) target = $region24
      $region23: #{op.1} parent=5 // pred_region
        // Predicated region
        $region25: #{op.1} parent=23 // pred_check
          %p131 = pneg %p32
        $region26: #{op.1} parent=23 // pred_check_branch
          %133 = sbr.rel (%p131) target = $region28
        $region27: #{op.1} parent=23 // pred_region
          %s134 = smul.u32 32, %s12
          %p135 = scmp.lt.s32.totalorder %s134, 63
          %s136 = scalar_select %p135, %s134, 63
          %s137 = smul.addr %s136, 2
          %s138 = smul.addr %s137, 4
          %s139 = scalar_lea.vmem %s0, %s138
          %s140 = smul.u32 32, %s12
        $region28: #{op.1} parent=23 // pred_fallthru
          _
      $region24: #{op.1} parent=5 // pred_fallthru
        _
      %p141 = scmp.le.s32.totalorder 1, %s12
      %p142 = scmp.lt.s32.totalorder %s12, 3
      %p143 = pnand %p141, %p142
      %p144 = pneg %p143
      // Predicated region
      $region29: #{op.1} parent=5 // pred_check
        _
      $region30: #{op.1} parent=5 // pred_check_branch
        %146 = sbr.rel (%p143) target = $region32
      $region31: #{op.1} parent=5 // pred_region
        %s147 = ssub.s32 %s12, 1
        %s148 = smul.u32 32, %s17
        %p149 = scmp.lt.s32.totalorder %s148, 63
        %s150 = scalar_select %p149, %s148, 63
        %s151 = smul.addr %s150, 2
        %s152 = smul.addr %s151, 4
        %s153 = scalar_lea.vmem %s0, %s152
        %p154 = pneg %p38
        %p155 = pneg %p35
        %p156 = pneg %p59
        %p157 = pneg %p56
        %p158 = pneg %p80
        %p159 = pneg %p77
        %p160 = pneg %p106
        %p161 = pneg %p103
        %s162 = sand.u32 %s93, 1
        %s163 = scalar_lea.sflag [#allocation3], %s162
        %s164 = sand.u32 %s93, 1
        %s165 = smul.addr %s164, 256
        %s166 = scalar_lea.vmem [#allocation2], %s165
        %s167 = smul.u32 32, %s17
        %p168 = scmp.lt.s32.totalorder %s167, 63
        %s169 = scalar_select %p168, %s167, 63
        %s170 = smul.addr %s169, 2
        %s171 = smul.addr %s170, 4
        %s172 = scalar_lea.vmem %s0, %s171
        %s173 = smul.u32 32, %s17
        %s174 = smul.u32 32, %s17
        %v176 = vld [vmem:[%s172] sm:$0xff]
        %v177 = vld [vmem:[%s172 + $0x8] sm:$0xff]
        %v178 = vld [vmem:[%s172 + $0x10] sm:$0xff]
        %v179 = vld [vmem:[%s172 + $0x18] sm:$0xff]
        %v180 = vld [vmem:[%s172 + $0x20] sm:$0xff]
        %v181 = vld [vmem:[%s172 + $0x28] sm:$0xff]
        %v182 = vld [vmem:[%s172 + $0x30] sm:$0xff]
        %v183 = vld [vmem:[%s172 + $0x38] sm:$0xff]
        %v184 = vld [vmem:[%s172 + $0x40] sm:$0xff]
        %v185 = vld [vmem:[%s172 + $0x48] sm:$0xff]
        %v186 = vld [vmem:[%s172 + $0x50] sm:$0xff]
        %v187 = vld [vmem:[%s172 + $0x58] sm:$0xff]
        %v188 = vld [vmem:[%s172 + $0x60] sm:$0xff]
        %v189 = vld [vmem:[%s172 + $0x68] sm:$0xff]
        %v190 = vld [vmem:[%s172 + $0x70] sm:$0xff]
        %v191 = vld [vmem:[%s172 + $0x78] sm:$0xff]
        %v192 = vld [vmem:[%s172 + $0x80] sm:$0xff]
        %v193 = vld [vmem:[%s172 + $0x88] sm:$0xff]
        %v194 = vld [vmem:[%s172 + $0x90] sm:$0xff]
        %v195 = vld [vmem:[%s172 + $0x98] sm:$0xff]
        %v196 = vld [vmem:[%s172 + $0xa0] sm:$0xff]
        %v197 = vld [vmem:[%s172 + $0xa8] sm:$0xff]
        %v198 = vld [vmem:[%s172 + $0xb0] sm:$0xff]
        %v199 = vld [vmem:[%s172 + $0xb8] sm:$0xff]
        %v200 = vld [vmem:[%s172 + $0xc0] sm:$0xff]
        %v201 = vld [vmem:[%s172 + $0xc8] sm:$0xff]
        %v202 = vld [vmem:[%s172 + $0xd0] sm:$0xff]
        %v203 = vld [vmem:[%s172 + $0xd8] sm:$0xff]
        %v204 = vld [vmem:[%s172 + $0xe0] sm:$0xff]
        %v205 = vld [vmem:[%s172 + $0xe8] sm:$0xff]
        %v206 = vld [vmem:[%s172 + $0xf0] sm:$0xff]
        %v207 = vld [vmem:[%s172 + $0xf8] sm:$0xff]
        %v208 = vld [vmem:[%s1] sm:$0xf]
        %v209 = vld [vmem:[%s1 + $0x4] sm:$0xf]
        %v210 = vld [vmem:[%s1 + $0x8] sm:$0xf]
        %v211 = vld [vmem:[%s1 + $0xc] sm:$0xf]
        %v212 = vld [vmem:[%s1 + $0x10] sm:$0xf]
        %v213 = vld [vmem:[%s1 + $0x14] sm:$0xf]
        %v214 = vld [vmem:[%s1 + $0x18] sm:$0xf]
        %v215 = vld [vmem:[%s1 + $0x1c] sm:$0xf]
        %v216 = vld [vmem:[%s1 + $0x20] sm:$0xf]
        %v217 = vld [vmem:[%s1 + $0x24] sm:$0xf]
        %v218 = vld [vmem:[%s1 + $0x28] sm:$0xf]
        %v219 = vld [vmem:[%s1 + $0x2c] sm:$0xf]
        %v220 = vld [vmem:[%s1 + $0x30] sm:$0xf]
        %v221 = vld [vmem:[%s1 + $0x34] sm:$0xf]
        %v222 = vld [vmem:[%s1 + $0x38] sm:$0xf]
        %v223 = vld [vmem:[%s1 + $0x3c] sm:$0xf]
        %v224 = vld [vmem:[%s1 + $0x40] sm:$0xf]
        %v225 = vld [vmem:[%s1 + $0x44] sm:$0xf]
        %v226 = vld [vmem:[%s1 + $0x48] sm:$0xf]
        %v227 = vld [vmem:[%s1 + $0x4c] sm:$0xf]
        %v228 = vld [vmem:[%s1 + $0x50] sm:$0xf]
        %v229 = vld [vmem:[%s1 + $0x54] sm:$0xf]
        %v230 = vld [vmem:[%s1 + $0x58] sm:$0xf]
        %v231 = vld [vmem:[%s1 + $0x5c] sm:$0xf]
        %v232 = vld [vmem:[%s1 + $0x60] sm:$0xf]
        %v233 = vld [vmem:[%s1 + $0x64] sm:$0xf]
        %v234 = vld [vmem:[%s1 + $0x68] sm:$0xf]
        %v235 = vld [vmem:[%s1 + $0x6c] sm:$0xf]
        %v236 = vld [vmem:[%s1 + $0x70] sm:$0xf]
        %v237 = vld [vmem:[%s1 + $0x74] sm:$0xf]
        %v238 = vld [vmem:[%s1 + $0x78] sm:$0xf]
        %v239 = vld [vmem:[%s1 + $0x7c] sm:$0xf]
        %v272 = vunpack.c.l.b16 %v176
        %v273 = vunpack.c.h.b16 %v176
        %v274 = vunpack.c.l.b16 %v177
        %v275 = vunpack.c.h.b16 %v177
        %v276 = vunpack.c.l.b16 %v178
        %v277 = vunpack.c.h.b16 %v178
        %v278 = vunpack.c.l.b16 %v179
        %v279 = vunpack.c.h.b16 %v179
        %v280 = vunpack.c.l.b16 %v180
        %v281 = vunpack.c.h.b16 %v180
        %v282 = vunpack.c.l.b16 %v181
        %v283 = vunpack.c.h.b16 %v181
        %v284 = vunpack.c.l.b16 %v182
        %v285 = vunpack.c.h.b16 %v182
        %v286 = vunpack.c.l.b16 %v183
        %v287 = vunpack.c.h.b16 %v183
        %v288 = vunpack.c.l.b16 %v184
        %v289 = vunpack.c.h.b16 %v184
        %v290 = vunpack.c.l.b16 %v185
        %v291 = vunpack.c.h.b16 %v185
        %v292 = vunpack.c.l.b16 %v186
        %v293 = vunpack.c.h.b16 %v186
        %v294 = vunpack.c.l.b16 %v187
        %v295 = vunpack.c.h.b16 %v187
        %v296 = vunpack.c.l.b16 %v188
        %v297 = vunpack.c.h.b16 %v188
        %v298 = vunpack.c.l.b16 %v189
        %v299 = vunpack.c.h.b16 %v189
        %v300 = vunpack.c.l.b16 %v190
        %v301 = vunpack.c.h.b16 %v190
        %v302 = vunpack.c.l.b16 %v191
        %v303 = vunpack.c.h.b16 %v191
        %v304 = vunpack.c.l.b16 %v192
        %v305 = vunpack.c.h.b16 %v192
        %v306 = vunpack.c.l.b16 %v193
        %v307 = vunpack.c.h.b16 %v193
        %v308 = vunpack.c.l.b16 %v194
        %v309 = vunpack.c.h.b16 %v194
        %v310 = vunpack.c.l.b16 %v195
        %v311 = vunpack.c.h.b16 %v195
        %v312 = vunpack.c.l.b16 %v196
        %v313 = vunpack.c.h.b16 %v196
        %v314 = vunpack.c.l.b16 %v197
        %v315 = vunpack.c.h.b16 %v197
        %v316 = vunpack.c.l.b16 %v198
        %v317 = vunpack.c.h.b16 %v198
        %v318 = vunpack.c.l.b16 %v199
        %v319 = vunpack.c.h.b16 %v199
        %v320 = vunpack.c.l.b16 %v200
        %v321 = vunpack.c.h.b16 %v200
        %v322 = vunpack.c.l.b16 %v201
        %v323 = vunpack.c.h.b16 %v201
        %v324 = vunpack.c.l.b16 %v202
        %v325 = vunpack.c.h.b16 %v202
        %v326 = vunpack.c.l.b16 %v203
        %v327 = vunpack.c.h.b16 %v203
        %v328 = vunpack.c.l.b16 %v204
        %v329 = vunpack.c.h.b16 %v204
        %v330 = vunpack.c.l.b16 %v205
        %v331 = vunpack.c.h.b16 %v205
        %v332 = vunpack.c.l.b16 %v206
        %v333 = vunpack.c.h.b16 %v206
        %v334 = vunpack.c.l.b16 %v207
        %v335 = vunpack.c.h.b16 %v207
        %v336 = vpack.c.b16 %v274, %v272
        %v337 = vpack.c.b16 %v275, %v273
        %v338 = vpack.c.b16 %v278, %v276
        %v339 = vpack.c.b16 %v279, %v277
        %v340 = vpack.c.b16 %v282, %v280
        %v341 = vpack.c.b16 %v283, %v281
        %v342 = vpack.c.b16 %v286, %v284
        %v343 = vpack.c.b16 %v287, %v285
        %v344 = vpack.c.b16 %v290, %v288
        %v345 = vpack.c.b16 %v291, %v289
        %v346 = vpack.c.b16 %v294, %v292
        %v347 = vpack.c.b16 %v295, %v293
        %v348 = vpack.c.b16 %v298, %v296
        %v349 = vpack.c.b16 %v299, %v297
        %v350 = vpack.c.b16 %v302, %v300
        %v351 = vpack.c.b16 %v303, %v301
        %v352 = vpack.c.b16 %v306, %v304
        %v353 = vpack.c.b16 %v307, %v305
        %v354 = vpack.c.b16 %v310, %v308
        %v355 = vpack.c.b16 %v311, %v309
        %v356 = vpack.c.b16 %v314, %v312
        %v357 = vpack.c.b16 %v315, %v313
        %v358 = vpack.c.b16 %v318, %v316
        %v359 = vpack.c.b16 %v319, %v317
        %v360 = vpack.c.b16 %v322, %v320
        %v361 = vpack.c.b16 %v323, %v321
        %v362 = vpack.c.b16 %v326, %v324
        %v363 = vpack.c.b16 %v327, %v325
        %v364 = vpack.c.b16 %v330, %v328
        %v365 = vpack.c.b16 %v331, %v329
        %v366 = vpack.c.b16 %v334, %v332
        %v367 = vpack.c.b16 %v335, %v333
        %v432 = vunpack.c.l.b16 %v208
        %v433 = vunpack.c.l.b16 %v209
        %v434 = vunpack.c.l.b16 %v210
        %v435 = vunpack.c.l.b16 %v211
        %v436 = vunpack.c.l.b16 %v212
        %v437 = vunpack.c.l.b16 %v213
        %v438 = vunpack.c.l.b16 %v214
        %v439 = vunpack.c.l.b16 %v215
        %v440 = vunpack.c.l.b16 %v216
        %v441 = vunpack.c.l.b16 %v217
        %v442 = vunpack.c.l.b16 %v218
        %v443 = vunpack.c.l.b16 %v219
        %v444 = vunpack.c.l.b16 %v220
        %v445 = vunpack.c.l.b16 %v221
        %v446 = vunpack.c.l.b16 %v222
        %v447 = vunpack.c.l.b16 %v223
        %v448 = vunpack.c.l.b16 %v224
        %v449 = vunpack.c.l.b16 %v225
        %v450 = vunpack.c.l.b16 %v226
        %v451 = vunpack.c.l.b16 %v227
        %v452 = vunpack.c.l.b16 %v228
        %v453 = vunpack.c.l.b16 %v229
        %v454 = vunpack.c.l.b16 %v230
        %v455 = vunpack.c.l.b16 %v231
        %v456 = vunpack.c.l.b16 %v232
        %v457 = vunpack.c.l.b16 %v233
        %v458 = vunpack.c.l.b16 %v234
        %v459 = vunpack.c.l.b16 %v235
        %v460 = vunpack.c.l.b16 %v236
        %v461 = vunpack.c.l.b16 %v237
        %v462 = vunpack.c.l.b16 %v238
        %v463 = vunpack.c.l.b16 %v239
        %v464 = vpack.c.b16 %v433, %v432
        %v465 = vpack.c.b16 %v435, %v434
        %v466 = vpack.c.b16 %v437, %v436
        %v467 = vpack.c.b16 %v439, %v438
        %v468 = vpack.c.b16 %v441, %v440
        %v469 = vpack.c.b16 %v443, %v442
        %v470 = vpack.c.b16 %v445, %v444
        %v471 = vpack.c.b16 %v447, %v446
        %v472 = vpack.c.b16 %v449, %v448
        %v473 = vpack.c.b16 %v451, %v450
        %v474 = vpack.c.b16 %v453, %v452
        %v475 = vpack.c.b16 %v455, %v454
        %v476 = vpack.c.b16 %v457, %v456
        %v477 = vpack.c.b16 %v459, %v458
        %v478 = vpack.c.b16 %v461, %v460
        %v479 = vpack.c.b16 %v463, %v462
        %496 = vmatprep.subr.bf16.mxu0 0
        %497 = vmatpush1.bf16.msra.mxu0 %v464
        %498 = vmatprep.subr.bf16.mxu0 0
        %499 = vmatpush1.bf16.msra.mxu0 %v465
        %500 = vmatprep.subr.bf16.mxu0 0
        %501 = vmatpush1.bf16.msra.mxu0 %v466
        %502 = vmatprep.subr.bf16.mxu0 0
        %503 = vmatpush1.bf16.msra.mxu0 %v467
        %504 = vmatprep.subr.bf16.mxu0 0
        %505 = vmatpush1.bf16.msra.mxu0 %v468
        %506 = vmatprep.subr.bf16.mxu0 0
        %507 = vmatpush1.bf16.msra.mxu0 %v469
        %508 = vmatprep.subr.bf16.mxu0 0
        %509 = vmatpush1.bf16.msra.mxu0 %v470
        %510 = vmatprep.subr.bf16.mxu0 0
        %511 = vmatpush1.bf16.msra.mxu0 %v471
        %512 = vmatprep.subr.bf16.mxu0 0
        %513 = vmatpush1.bf16.msra.mxu0 %v472
        %514 = vmatprep.subr.bf16.mxu0 0
        %515 = vmatpush1.bf16.msra.mxu0 %v473
        %516 = vmatprep.subr.bf16.mxu0 0
        %517 = vmatpush1.bf16.msra.mxu0 %v474
        %518 = vmatprep.subr.bf16.mxu0 0
        %519 = vmatpush1.bf16.msra.mxu0 %v475
        %520 = vmatprep.subr.bf16.mxu0 0
        %521 = vmatpush1.bf16.msra.mxu0 %v476
        %522 = vmatprep.subr.bf16.mxu0 0
        %523 = vmatpush1.bf16.msra.mxu0 %v477
        %524 = vmatprep.subr.bf16.mxu0 0
        %525 = vmatpush1.bf16.msra.mxu0 %v478
        %526 = vmatprep.subr.bf16.mxu0 0
        %527 = vmatpush1.bf16.msra.mxu0 %v479
        %528 = vmatprep.mubr.bf16.mxu0 %v337
        %529 = vmatmul.mubr.bf16.gmra.mrb[0].mxu0 %v336
        %v530 = vpop.f32.mrb[0].mxu0
        %v531 = vadd.f32 0.0, %v530
        %v532 = vpop.f32.mrb[0].mxu0
        %v533 = vpop.f32.mrb[0].mxu0
        %v534 = vadd.f32 0.0, %v533
        %v535 = vpop.f32.mrb[0].mxu0
        %536 = vmatprep.mubr.bf16.mxu0 %v339
        %537 = vmatmul.mubr.bf16.gmra.mrb[0].mxu0 %v338
        %v538 = vpop.f32.mrb[0].mxu0
        %v539 = vadd.f32 0.0, %v538
        %v540 = vpop.f32.mrb[0].mxu0
        %v541 = vpop.f32.mrb[0].mxu0
        %v542 = vadd.f32 0.0, %v541
        %v543 = vpop.f32.mrb[0].mxu0
        %544 = vmatprep.mubr.bf16.mxu0 %v341
        %545 = vmatmul.mubr.bf16.gmra.mrb[0].mxu0 %v340
        %v546 = vpop.f32.mrb[0].mxu0
        %v547 = vadd.f32 0.0, %v546
        %v548 = vpop.f32.mrb[0].mxu0
        %v549 = vpop.f32.mrb[0].mxu0
        %v550 = vadd.f32 0.0, %v549
        %v551 = vpop.f32.mrb[0].mxu0
        %552 = vmatprep.mubr.bf16.mxu0 %v343
        %553 = vmatmul.mubr.bf16.gmra.mrb[0].mxu0 %v342
        %v554 = vpop.f32.mrb[0].mxu0
        %v555 = vadd.f32 0.0, %v554
        %v556 = vpop.f32.mrb[0].mxu0
        %v557 = vpop.f32.mrb[0].mxu0
        %v558 = vadd.f32 0.0, %v557
        %v559 = vpop.f32.mrb[0].mxu0
        %560 = vmatprep.mubr.bf16.mxu0 %v345
        %561 = vmatmul.mubr.bf16.gmra.mrb[0].mxu0 %v344
        %v562 = vpop.f32.mrb[0].mxu0
        %v563 = vadd.f32 0.0, %v562
        %v564 = vpop.f32.mrb[0].mxu0
        %v565 = vpop.f32.mrb[0].mxu0
        %v566 = vadd.f32 0.0, %v565
        %v567 = vpop.f32.mrb[0].mxu0
        %568 = vmatprep.mubr.bf16.mxu0 %v347
        %569 = vmatmul.mubr.bf16.gmra.mrb[0].mxu0 %v346
        %v570 = vpop.f32.mrb[0].mxu0
        %v571 = vadd.f32 0.0, %v570
        %v572 = vpop.f32.mrb[0].mxu0
        %v573 = vpop.f32.mrb[0].mxu0
        %v574 = vadd.f32 0.0, %v573
        %v575 = vpop.f32.mrb[0].mxu0
        %576 = vmatprep.mubr.bf16.mxu0 %v349
        %577 = vmatmul.mubr.bf16.gmra.mrb[0].mxu0 %v348
        %v578 = vpop.f32.mrb[0].mxu0
        %v579 = vadd.f32 0.0, %v578
        %v580 = vpop.f32.mrb[0].mxu0
        %v581 = vpop.f32.mrb[0].mxu0
        %v582 = vadd.f32 0.0, %v581
        %v583 = vpop.f32.mrb[0].mxu0
        %584 = vmatprep.mubr.bf16.mxu0 %v351
        %585 = vmatmul.mubr.bf16.gmra.mrb[0].mxu0 %v350
        %v586 = vpop.f32.mrb[0].mxu0
        %v587 = vadd.f32 0.0, %v586
        %v588 = vpop.f32.mrb[0].mxu0
        %v589 = vpop.f32.mrb[0].mxu0
        %v590 = vadd.f32 0.0, %v589
        %v591 = vpop.f32.mrb[0].mxu0
        %592 = vmatprep.mubr.bf16.mxu0 %v353
        %593 = vmatmul.mubr.bf16.gmra.mrb[0].mxu0 %v352
        %v594 = vpop.f32.mrb[0].mxu0
        %v595 = vadd.f32 0.0, %v594
        %v596 = vpop.f32.mrb[0].mxu0
        %v597 = vpop.f32.mrb[0].mxu0
        %v598 = vadd.f32 0.0, %v597
        %v599 = vpop.f32.mrb[0].mxu0
        %600 = vmatprep.mubr.bf16.mxu0 %v355
        %601 = vmatmul.mubr.bf16.gmra.mrb[0].mxu0 %v354
        %v602 = vpop.f32.mrb[0].mxu0
        %v603 = vadd.f32 0.0, %v602
        %v604 = vpop.f32.mrb[0].mxu0
        %v605 = vpop.f32.mrb[0].mxu0
        %v606 = vadd.f32 0.0, %v605
        %v607 = vpop.f32.mrb[0].mxu0
        %608 = vmatprep.mubr.bf16.mxu0 %v357
        %609 = vmatmul.mubr.bf16.gmra.mrb[0].mxu0 %v356
        %v610 = vpop.f32.mrb[0].mxu0
        %v611 = vadd.f32 0.0, %v610
        %v612 = vpop.f32.mrb[0].mxu0
        %v613 = vpop.f32.mrb[0].mxu0
        %v614 = vadd.f32 0.0, %v613
        %v615 = vpop.f32.mrb[0].mxu0
        %616 = vmatprep.mubr.bf16.mxu0 %v359
        %617 = vmatmul.mubr.bf16.gmra.mrb[0].mxu0 %v358
        %v618 = vpop.f32.mrb[0].mxu0
        %v619 = vadd.f32 0.0, %v618
        %v620 = vpop.f32.mrb[0].mxu0
        %v621 = vpop.f32.mrb[0].mxu0
        %v622 = vadd.f32 0.0, %v621
        %v623 = vpop.f32.mrb[0].mxu0
        %624 = vmatprep.mubr.bf16.mxu0 %v361
        %625 = vmatmul.mubr.bf16.gmra.mrb[0].mxu0 %v360
        %v626 = vpop.f32.mrb[0].mxu0
        %v627 = vadd.f32 0.0, %v626
        %v628 = vpop.f32.mrb[0].mxu0
        %v629 = vpop.f32.mrb[0].mxu0
        %v630 = vadd.f32 0.0, %v629
        %v631 = vpop.f32.mrb[0].mxu0
        %632 = vmatprep.mubr.bf16.mxu0 %v363
        %633 = vmatmul.mubr.bf16.gmra.mrb[0].mxu0 %v362
        %v634 = vpop.f32.mrb[0].mxu0
        %v635 = vadd.f32 0.0, %v634
        %v636 = vpop.f32.mrb[0].mxu0
        %v637 = vpop.f32.mrb[0].mxu0
        %v638 = vadd.f32 0.0, %v637
        %v639 = vpop.f32.mrb[0].mxu0
        %640 = vmatprep.mubr.bf16.mxu0 %v365
        %641 = vmatmul.mubr.bf16.gmra.mrb[0].mxu0 %v364
        %v642 = vpop.f32.mrb[0].mxu0
        %v643 = vadd.f32 0.0, %v642
        %v644 = vpop.f32.mrb[0].mxu0
        %v645 = vpop.f32.mrb[0].mxu0
        %v646 = vadd.f32 0.0, %v645
        %v647 = vpop.f32.mrb[0].mxu0
        %648 = vmatprep.mubr.bf16.mxu0 %v367
        %649 = vmatmul.mubr.bf16.gmra.mrb[0].mxu0 %v366
        %v650 = vpop.f32.mrb[0].mxu0
        %v651 = vadd.f32 0.0, %v650
        %v652 = vpop.f32.mrb[0].mxu0
        %v653 = vpop.f32.mrb[0].mxu0
        %v654 = vadd.f32 0.0, %v653
        %v655 = vpop.f32.mrb[0].mxu0
        %656 = vdwg.mxu0
        %v657 = vmul.f32 %v531, 0.0007178004
        %v658 = vmul.f32 %v534, 0.0007178004
        %v659 = vmul.f32 %v539, 0.0007178004
        %v660 = vmul.f32 %v542, 0.0007178004
        %v661 = vmul.f32 %v547, 0.0007178004
        %v662 = vmul.f32 %v550, 0.0007178004
        %v663 = vmul.f32 %v555, 0.0007178004
        %v664 = vmul.f32 %v558, 0.0007178004
        %v665 = vmul.f32 %v563, 0.0007178004
        %v666 = vmul.f32 %v566, 0.0007178004
        %v667 = vmul.f32 %v571, 0.0007178004
        %v668 = vmul.f32 %v574, 0.0007178004
        %v669 = vmul.f32 %v579, 0.0007178004
        %v670 = vmul.f32 %v582, 0.0007178004
        %v671 = vmul.f32 %v587, 0.0007178004
        %v672 = vmul.f32 %v590, 0.0007178004
        %v673 = vmul.f32 %v595, 0.0007178004
        %v674 = vmul.f32 %v598, 0.0007178004
        %v675 = vmul.f32 %v603, 0.0007178004
        %v676 = vmul.f32 %v606, 0.0007178004
        %v677 = vmul.f32 %v611, 0.0007178004
        %v678 = vmul.f32 %v614, 0.0007178004
        %v679 = vmul.f32 %v619, 0.0007178004
        %v680 = vmul.f32 %v622, 0.0007178004
        %v681 = vmul.f32 %v627, 0.0007178004
        %v682 = vmul.f32 %v630, 0.0007178004
        %v683 = vmul.f32 %v635, 0.0007178004
        %v684 = vmul.f32 %v638, 0.0007178004
        %v685 = vmul.f32 %v643, 0.0007178004
        %v686 = vmul.f32 %v646, 0.0007178004
        %v687 = vmul.f32 %v651, 0.0007178004
        %v688 = vmul.f32 %v654, 0.0007178004
        %v689 = vld [vmem:[%s2] sm:$0x1]
        %v691 = vlaneseq
        %v692 = vshrl.u32 %v691, 7
        %v693 = vsub.s32 0, %v692
        %v694 = vrot.slane %v689, %v693
        %v696 = vadd.f32 %v657, %v694
        %v697 = vadd.f32 %v658, %v694
        %v698 = vadd.f32 %v659, %v694
        %v699 = vadd.f32 %v660, %v694
        %v700 = vadd.f32 %v661, %v694
        %v701 = vadd.f32 %v662, %v694
        %v702 = vadd.f32 %v663, %v694
        %v703 = vadd.f32 %v664, %v694
        %v704 = vadd.f32 %v665, %v694
        %v705 = vadd.f32 %v666, %v694
        %v706 = vadd.f32 %v667, %v694
        %v707 = vadd.f32 %v668, %v694
        %v708 = vadd.f32 %v669, %v694
        %v709 = vadd.f32 %v670, %v694
        %v710 = vadd.f32 %v671, %v694
        %v711 = vadd.f32 %v672, %v694
        %v712 = vadd.f32 %v673, %v694
        %v713 = vadd.f32 %v674, %v694
        %v714 = vadd.f32 %v675, %v694
        %v715 = vadd.f32 %v676, %v694
        %v716 = vadd.f32 %v677, %v694
        %v717 = vadd.f32 %v678, %v694
        %v718 = vadd.f32 %v679, %v694
        %v719 = vadd.f32 %v680, %v694
        %v720 = vadd.f32 %v681, %v694
        %v721 = vadd.f32 %v682, %v694
        %v722 = vadd.f32 %v683, %v694
        %v723 = vadd.f32 %v684, %v694
        %v724 = vadd.f32 %v685, %v694
        %v725 = vadd.f32 %v686, %v694
        %v726 = vadd.f32 %v687, %v694
        %v727 = vadd.f32 %v688, %v694
        %v728 = vround.ne.pseudo %v696
        %v729 = vround.ne.pseudo %v697
        %v730 = vround.ne.pseudo %v698
        %v731 = vround.ne.pseudo %v699
        %v732 = vround.ne.pseudo %v700
        %v733 = vround.ne.pseudo %v701
        %v734 = vround.ne.pseudo %v702
        %v735 = vround.ne.pseudo %v703
        %v736 = vround.ne.pseudo %v704
        %v737 = vround.ne.pseudo %v705
        %v738 = vround.ne.pseudo %v706
        %v739 = vround.ne.pseudo %v707
        %v740 = vround.ne.pseudo %v708
        %v741 = vround.ne.pseudo %v709
        %v742 = vround.ne.pseudo %v710
        %v743 = vround.ne.pseudo %v711
        %v744 = vround.ne.pseudo %v712
        %v745 = vround.ne.pseudo %v713
        %v746 = vround.ne.pseudo %v714
        %v747 = vround.ne.pseudo %v715
        %v748 = vround.ne.pseudo %v716
        %v749 = vround.ne.pseudo %v717
        %v750 = vround.ne.pseudo %v718
        %v751 = vround.ne.pseudo %v719
        %v752 = vround.ne.pseudo %v720
        %v753 = vround.ne.pseudo %v721
        %v754 = vround.ne.pseudo %v722
        %v755 = vround.ne.pseudo %v723
        %v756 = vround.ne.pseudo %v724
        %v757 = vround.ne.pseudo %v725
        %v758 = vround.ne.pseudo %v726
        %v759 = vround.ne.pseudo %v727
        %v760 = vadd.f32 %v728, 64.0
        %v761 = vadd.f32 %v729, 64.0
        %v762 = vadd.f32 %v730, 64.0
        %v763 = vadd.f32 %v731, 64.0
        %v764 = vadd.f32 %v732, 64.0
        %v765 = vadd.f32 %v733, 64.0
        %v766 = vadd.f32 %v734, 64.0
        %v767 = vadd.f32 %v735, 64.0
        %v768 = vadd.f32 %v736, 64.0
        %v769 = vadd.f32 %v737, 64.0
        %v770 = vadd.f32 %v738, 64.0
        %v771 = vadd.f32 %v739, 64.0
        %v772 = vadd.f32 %v740, 64.0
        %v773 = vadd.f32 %v741, 64.0
        %v774 = vadd.f32 %v742, 64.0
        %v775 = vadd.f32 %v743, 64.0
        %v776 = vadd.f32 %v744, 64.0
        %v777 = vadd.f32 %v745, 64.0
        %v778 = vadd.f32 %v746, 64.0
        %v779 = vadd.f32 %v747, 64.0
        %v780 = vadd.f32 %v748, 64.0
        %v781 = vadd.f32 %v749, 64.0
        %v782 = vadd.f32 %v750, 64.0
        %v783 = vadd.f32 %v751, 64.0
        %v784 = vadd.f32 %v752, 64.0
        %v785 = vadd.f32 %v753, 64.0
        %v786 = vadd.f32 %v754, 64.0
        %v787 = vadd.f32 %v755, 64.0
        %v788 = vadd.f32 %v756, 64.0
        %v789 = vadd.f32 %v757, 64.0
        %v790 = vadd.f32 %v758, 64.0
        %v791 = vadd.f32 %v759, 64.0
        %v792 = vmax.f32 %v760, 0.0
        %v793 = vmax.f32 %v761, 0.0
        %v794 = vmax.f32 %v762, 0.0
        %v795 = vmax.f32 %v763, 0.0
        %v796 = vmax.f32 %v764, 0.0
        %v797 = vmax.f32 %v765, 0.0
        %v798 = vmax.f32 %v766, 0.0
        %v799 = vmax.f32 %v767, 0.0
        %v800 = vmax.f32 %v768, 0.0
        %v801 = vmax.f32 %v769, 0.0
        %v802 = vmax.f32 %v770, 0.0
        %v803 = vmax.f32 %v771, 0.0
        %v804 = vmax.f32 %v772, 0.0
        %v805 = vmax.f32 %v773, 0.0
        %v806 = vmax.f32 %v774, 0.0
        %v807 = vmax.f32 %v775, 0.0
        %v808 = vmax.f32 %v776, 0.0
        %v809 = vmax.f32 %v777, 0.0
        %v810 = vmax.f32 %v778, 0.0
        %v811 = vmax.f32 %v779, 0.0
        %v812 = vmax.f32 %v780, 0.0
        %v813 = vmax.f32 %v781, 0.0
        %v814 = vmax.f32 %v782, 0.0
        %v815 = vmax.f32 %v783, 0.0
        %v816 = vmax.f32 %v784, 0.0
        %v817 = vmax.f32 %v785, 0.0
        %v818 = vmax.f32 %v786, 0.0
        %v819 = vmax.f32 %v787, 0.0
        %v820 = vmax.f32 %v788, 0.0
        %v821 = vmax.f32 %v789, 0.0
        %v822 = vmax.f32 %v790, 0.0
        %v823 = vmax.f32 %v791, 0.0
        %v824 = vmin.f32 %v792, 255.0
        %v825 = vmin.f32 %v793, 255.0
        %v826 = vmin.f32 %v794, 255.0
        %v827 = vmin.f32 %v795, 255.0
        %v828 = vmin.f32 %v796, 255.0
        %v829 = vmin.f32 %v797, 255.0
        %v830 = vmin.f32 %v798, 255.0
        %v831 = vmin.f32 %v799, 255.0
        %v832 = vmin.f32 %v800, 255.0
        %v833 = vmin.f32 %v801, 255.0
        %v834 = vmin.f32 %v802, 255.0
        %v835 = vmin.f32 %v803, 255.0
        %v836 = vmin.f32 %v804, 255.0
        %v837 = vmin.f32 %v805, 255.0
        %v838 = vmin.f32 %v806, 255.0
        %v839 = vmin.f32 %v807, 255.0
        %v840 = vmin.f32 %v808, 255.0
        %v841 = vmin.f32 %v809, 255.0
        %v842 = vmin.f32 %v810, 255.0
        %v843 = vmin.f32 %v811, 255.0
        %v844 = vmin.f32 %v812, 255.0
        %v845 = vmin.f32 %v813, 255.0
        %v846 = vmin.f32 %v814, 255.0
        %v847 = vmin.f32 %v815, 255.0
        %v848 = vmin.f32 %v816, 255.0
        %v849 = vmin.f32 %v817, 255.0
        %v850 = vmin.f32 %v818, 255.0
        %v851 = vmin.f32 %v819, 255.0
        %v852 = vmin.f32 %v820, 255.0
        %v853 = vmin.f32 %v821, 255.0
        %v854 = vmin.f32 %v822, 255.0
        %v855 = vmin.f32 %v823, 255.0
        %v856 = vsub.f32 %v824, 64.0
        %v857 = vsub.f32 %v825, 64.0
        %v858 = vsub.f32 %v826, 64.0
        %v859 = vsub.f32 %v827, 64.0
        %v860 = vsub.f32 %v828, 64.0
        %v861 = vsub.f32 %v829, 64.0
        %v862 = vsub.f32 %v830, 64.0
        %v863 = vsub.f32 %v831, 64.0
        %v864 = vsub.f32 %v832, 64.0
        %v865 = vsub.f32 %v833, 64.0
        %v866 = vsub.f32 %v834, 64.0
        %v867 = vsub.f32 %v835, 64.0
        %v868 = vsub.f32 %v836, 64.0
        %v869 = vsub.f32 %v837, 64.0
        %v870 = vsub.f32 %v838, 64.0
        %v871 = vsub.f32 %v839, 64.0
        %v872 = vsub.f32 %v840, 64.0
        %v873 = vsub.f32 %v841, 64.0
        %v874 = vsub.f32 %v842, 64.0
        %v875 = vsub.f32 %v843, 64.0
        %v876 = vsub.f32 %v844, 64.0
        %v877 = vsub.f32 %v845, 64.0
        %v878 = vsub.f32 %v846, 64.0
        %v879 = vsub.f32 %v847, 64.0
        %v880 = vsub.f32 %v848, 64.0
        %v881 = vsub.f32 %v849, 64.0
        %v882 = vsub.f32 %v850, 64.0
        %v883 = vsub.f32 %v851, 64.0
        %v884 = vsub.f32 %v852, 64.0
        %v885 = vsub.f32 %v853, 64.0
        %v886 = vsub.f32 %v854, 64.0
        %v887 = vsub.f32 %v855, 64.0
        %v888 = vmul.f32 %v856, 0.1
        %v889 = vmul.f32 %v857, 0.1
        %v890 = vmul.f32 %v858, 0.1
        %v891 = vmul.f32 %v859, 0.1
        %v892 = vmul.f32 %v860, 0.1
        %v893 = vmul.f32 %v861, 0.1
        %v894 = vmul.f32 %v862, 0.1
        %v895 = vmul.f32 %v863, 0.1
        %v896 = vmul.f32 %v864, 0.1
        %v897 = vmul.f32 %v865, 0.1
        %v898 = vmul.f32 %v866, 0.1
        %v899 = vmul.f32 %v867, 0.1
        %v900 = vmul.f32 %v868, 0.1
        %v901 = vmul.f32 %v869, 0.1
        %v902 = vmul.f32 %v870, 0.1
        %v903 = vmul.f32 %v871, 0.1
        %v904 = vmul.f32 %v872, 0.1
        %v905 = vmul.f32 %v873, 0.1
        %v906 = vmul.f32 %v874, 0.1
        %v907 = vmul.f32 %v875, 0.1
        %v908 = vmul.f32 %v876, 0.1
        %v909 = vmul.f32 %v877, 0.1
        %v910 = vmul.f32 %v878, 0.1
        %v911 = vmul.f32 %v879, 0.1
        %v912 = vmul.f32 %v880, 0.1
        %v913 = vmul.f32 %v881, 0.1
        %v914 = vmul.f32 %v882, 0.1
        %v915 = vmul.f32 %v883, 0.1
        %v916 = vmul.f32 %v884, 0.1
        %v917 = vmul.f32 %v885, 0.1
        %v918 = vmul.f32 %v886, 0.1
        %v919 = vmul.f32 %v887, 0.1
        %920 = vst [vmem:[%s166] sm:$0xff] %v888
        %921 = vst [vmem:[%s166 + $0x8] sm:$0xff] %v889
        %922 = vst [vmem:[%s166 + $0x10] sm:$0xff] %v890
        %923 = vst [vmem:[%s166 + $0x18] sm:$0xff] %v891
        %924 = vst [vmem:[%s166 + $0x20] sm:$0xff] %v892
        %925 = vst [vmem:[%s166 + $0x28] sm:$0xff] %v893
        %926 = vst [vmem:[%s166 + $0x30] sm:$0xff] %v894
        %927 = vst [vmem:[%s166 + $0x38] sm:$0xff] %v895
        %928 = vst [vmem:[%s166 + $0x40] sm:$0xff] %v896
        %929 = vst [vmem:[%s166 + $0x48] sm:$0xff] %v897
        %930 = vst [vmem:[%s166 + $0x50] sm:$0xff] %v898
        %931 = vst [vmem:[%s166 + $0x58] sm:$0xff] %v899
        %932 = vst [vmem:[%s166 + $0x60] sm:$0xff] %v900
        %933 = vst [vmem:[%s166 + $0x68] sm:$0xff] %v901
        %934 = vst [vmem:[%s166 + $0x70] sm:$0xff] %v902
        %935 = vst [vmem:[%s166 + $0x78] sm:$0xff] %v903
        %936 = vst [vmem:[%s166 + $0x80] sm:$0xff] %v904
        %937 = vst [vmem:[%s166 + $0x88] sm:$0xff] %v905
        %938 = vst [vmem:[%s166 + $0x90] sm:$0xff] %v906
        %939 = vst [vmem:[%s166 + $0x98] sm:$0xff] %v907
        %940 = vst [vmem:[%s166 + $0xa0] sm:$0xff] %v908
        %941 = vst [vmem:[%s166 + $0xa8] sm:$0xff] %v909
        %942 = vst [vmem:[%s166 + $0xb0] sm:$0xff] %v910
        %943 = vst [vmem:[%s166 + $0xb8] sm:$0xff] %v911
        %944 = vst [vmem:[%s166 + $0xc0] sm:$0xff] %v912
        %945 = vst [vmem:[%s166 + $0xc8] sm:$0xff] %v913
        %946 = vst [vmem:[%s166 + $0xd0] sm:$0xff] %v914
        %947 = vst [vmem:[%s166 + $0xd8] sm:$0xff] %v915
        %948 = vst [vmem:[%s166 + $0xe0] sm:$0xff] %v916
        %949 = vst [vmem:[%s166 + $0xe8] sm:$0xff] %v917
        %950 = vst [vmem:[%s166 + $0xf0] sm:$0xff] %v918
        %951 = vst [vmem:[%s166 + $0xf8] sm:$0xff] %v919
        %s952 = sand.u32 %s93, 1
        %s953 = scalar_lea.sflag [#allocation3], %s952
        %s954 = sand.u32 %s93, 1
        %s955 = smul.addr %s954, 256
        %s956 = scalar_lea.vmem [#allocation2], %s955
        // Predicated region
        $region33: #{op.1} parent=31 // pred_check
          %p957 = pneg %p103
        $region34: #{op.1} parent=31 // pred_check_branch
          %959 = sbr.rel (%p957) target = $region36
        $region35: #{op.1} parent=31 // pred_region
          %s960 = smul.u32 32, %s17
          %s962 = ssub.s32 4096, 4096
          %963 = vsyncadd %s953, %s962
          %s964 = smul.addr %s960, 128
          %s965 = scalar_lea.hbm %s3, %s964
          %s966 = sshll.u32 %s956, 4
          %s967 = int_to_ptr.vmem [resolvable:$true] %s966
          %972 = dma.vmem_to_hbm [thread:$0]  %s967, 4096, %s965, %s953, 128, 128, 8
        $region36: #{op.1} parent=31 // pred_fallthru
          _
      $region32: #{op.1} parent=5 // pred_fallthru
        _
      %p973 = scmp.le.s32.totalorder 2, %s12
      // Predicated region
      $region37: #{op.1} parent=5 // pred_check
        %p974 = pneg %p973
      $region38: #{op.1} parent=5 // pred_check_branch
        %976 = sbr.rel (%p974) target = $region40
      $region39: #{op.1} parent=5 // pred_region
        %s977 = ssub.s32 %s12, 2
        // Predicated region
        $region41: #{op.1} parent=39 // pred_check
          %p978 = pneg %p109
        $region42: #{op.1} parent=39 // pred_check_branch
          %980 = sbr.rel (%p978) target = $region44
        $region43: #{op.1} parent=39 // pred_region
          %s981 = sand.u32 %s94, 1
          %s982 = scalar_lea.sflag [#allocation3], %s981
          %s983 = sand.u32 %s94, 1
          %s984 = smul.addr %s983, 256
          %s985 = scalar_lea.vmem [#allocation2], %s984
          %986 = dma.done %s982, 4096
        $region44: #{op.1} parent=39 // pred_fallthru
          _
      $region40: #{op.1} parent=5 // pred_fallthru
        _
    $region6: #{op.1} parent=1 // loop_footer
      %s16 = sadd.s32 1, %s12
    $region7: #{op.1} parent=1 // loop_footer_branch
      %11 = sbr.rel target = $region3
    $region8: #{op.1} parent=1 // loop_exit
      _
    %987 = vsyncpa [#allocation3], 1
    %s988 = scalar_lea.sflag [#allocation3], 1
    %989 = vsyncpa %s988, 1

</llo_original>
